<compile_context>
chip_gen: v7x
topology: tpu7x:2x2x1
jax: 0.10.0
libtpu: 0.0.40
codegen_flags: <defaults>
</compile_context>

<pallas_src>
import functools
import math

import jax
import jax.numpy as jnp
from jax.experimental import pallas as pl
from jax.experimental.pallas import tpu as pltpu

_MAX_TILE_ROWS = 1024
_MAX_FOLD_WIDTH = 768          # cap on fold*h (bounds the segment matrix size)


def _sublane_pack(dtype):
    itemsize = jnp.dtype(dtype).itemsize
    return {4: 8, 2: 16, 1: 32}.get(itemsize, 8)


def _vmem_budget():
    """Generation-aware scoped-VMEM limit and tile-data budget (bytes)."""
    try:
        cap = pltpu.get_tpu_info().vmem_capacity_bytes
    except Exception:
        cap = 64 * 1024 * 1024          # conservative fallback (v7x per-TC size)
    # ~60% of physical VMEM: ~38 MiB on v7x (64 MiB/TC), ~77 MiB on v5e/v6e
    # (128 MiB); never below the 32 MiB default scoped limit.
    limit = max(32 * 1024 * 1024, min(int(cap * 0.6), 96 * 1024 * 1024))
    return limit, limit // 2


def _pick_tile_rows(num_rows, width, dtype, budget_bytes, extra_bytes=0):
    """Largest sublane-aligned row tile that fits the VMEM data budget."""
    pack = _sublane_pack(dtype)
    itemsize = jnp.dtype(dtype).itemsize
    # 2x double-buffered input + output tiles (native dtype) plus ~10 f32-sized
    # temporaries per element in the kernel body (x, u, d, d*d, s, y, casts).
    per_row_bytes = width * (4 * itemsize + 10 * 4)
    t = max(budget_bytes - extra_bytes, per_row_bytes) // per_row_bytes
    t = (t // pack) * pack
    t = max(pack, min(t, _MAX_TILE_ROWS))
    if num_rows <= t:
        return num_rows                 # single full-extent block (always legal)
    return t


def _layernorm_kernel(x_ref, w_ref, b_ref, o_ref, *, eps, inv_h):
    """Per-row LayerNorm over the last axis of a (tile_rows, H) tile.

    NOTE: a partial last row block reads uninitialized VMEM padding rows and
    feeds them through rsqrt; those rows are never stored and TPU does not
    trap on NaN/Inf, so this is benign -- do not "fix" it with masked loads.
    """
    x = x_ref[...].astype(jnp.float32)
    u = jnp.sum(x, axis=-1, keepdims=True) * inv_h
    d = x - u
    s = jnp.sum(d * d, axis=-1, keepdims=True) * inv_h
    y = d * jax.lax.rsqrt(s + eps)
    w = w_ref[...].astype(jnp.float32)
    b = b_ref[...].astype(jnp.float32)
    o_ref[...] = (w * y + b).astype(o_ref.dtype)


def _layernorm_folded_kernel(x_ref, seg_ref, w_ref, b_ref, o_ref, *, eps):
    """`fold` logical rows of width h packed into each lane-dense row.

    x_ref:   (tile_rows, width) with width = fold*h (a multiple of 128);
             logical segment g occupies lanes [g*h, (g+1)*h).
    seg_ref: (width, width) block-diagonal matrix with inv_h in each h x h
             diagonal block.  `x @ seg` yields every segment's mean already
             broadcast across that segment's lanes in one MXU op (the MXU is
             otherwise idle here), replacing 2*fold masked XLU reductions,
             iota/compare construction and selects per tile.
    """
    x = x_ref[...].astype(jnp.float32)
    seg = seg_ref[...]
    u = jnp.dot(x, seg, preferred_element_type=jnp.float32)
    d = x - u
    s = jnp.dot(d * d, seg, preferred_element_type=jnp.float32)
    y = d * jax.lax.rsqrt(s + eps)
    w = w_ref[...].astype(jnp.float32)
    b = b_ref[...].astype(jnp.float32)
    o_ref[...] = (w * y + b).astype(o_ref.dtype)


def layer_norm(x, weight, bias, eps=1e-12, tile_rows=None):
    """TF-style LayerNorm over the last axis.  x: (..., H); weight/bias: (H,)."""
    orig_shape = x.shape
    h = orig_shape[-1]
    x2 = x.reshape(-1, h)
    rows = x2.shape[0]
    vmem_limit, vmem_budget = _vmem_budget()

    # Lane folding: pack `fold` logical rows per lane-dense group so that
    # fold*h is a multiple of 128 (unmasked vld/vst for small / odd H).
    fold = 1
    if h % 128 != 0:
        cand = 128 // math.gcd(h, 128)            # lcm(h, 128) / h
        if cand * h <= _MAX_FOLD_WIDTH:
            fold = cand

    pad_rows = 0
    if fold > 1:
        pad_rows = (-rows) % fold                 # <= fold-1 host-padded rows
        if pad_rows:
            x2 = jnp.pad(x2, ((0, pad_rows), (0, 0)))
        width = fold * h
        rows_f = (rows + pad_rows) // fold
        xw = x2.reshape(rows_f, width)            # free row-major reshape
        w2 = jnp.tile(weight.reshape(1, h), (1, fold))
        b2 = jnp.tile(bias.reshape(1, h), (1, fold))
        # Block-diagonal segment-sum matrix, built once at trace time.
        seg = (jnp.kron(jnp.eye(fold, dtype=jnp.float32),
                        jnp.ones((h, h), dtype=jnp.float32)) * (1.0 / h))
        seg_bytes = 2 * width * width * 4         # double-buffered f32 copy
        kern = functools.partial(_layernorm_folded_kernel, eps=float(eps))
        extra_ins = (seg,)
        extra_specs = [pl.BlockSpec((width, width), lambda i: (0, 0))]
    else:
        # H is a multiple of 128 (already lane-dense), or too awkward to fold
        # (rare; falls back to masked partial stores on the trailing lanes).
        # TODO(synk): huge-lcm H (e.g. 200) could pad the lane dim to 128k
        # instead of using masked stores.
        width = h
        rows_f = rows
        xw = x2
        w2 = weight.reshape(1, h)
        b2 = bias.reshape(1, h)
        seg_bytes = 0
        kern = functools.partial(_layernorm_kernel, eps=float(eps), inv_h=1.0 / h)
        extra_ins = ()
        extra_specs = []

    pack = _sublane_pack(x.dtype)
    if tile_rows is None:
        tile_rows = _pick_tile_rows(rows_f, width, x.dtype, vmem_budget, seg_bytes)
    else:
        tile_rows = max(pack, (int(tile_rows) // pack) * pack)
    if tile_rows > rows_f:
        tile_rows = rows_f                        # full-extent block, always legal

    grid = (pl.cdiv(rows_f, tile_rows),)
    itemsize = jnp.dtype(x.dtype).itemsize
    matmul_flops = 4 * rows_f * width * width if fold > 1 else 0
    cost = pl.CostEstimate(
        flops=8 * rows * h + matmul_flops,
        transcendentals=rows,
        bytes_accessed=2 * rows_f * width * itemsize + 2 * width * itemsize
                       + seg_bytes // 2,
    )

    in_specs = ([pl.BlockSpec((tile_rows, width), lambda i: (i, 0))]
                + extra_specs
                + [pl.BlockSpec((1, width), lambda i: (0, 0)),
                   pl.BlockSpec((1, width), lambda i: (0, 0))])

    out = pl.pallas_call(
        kern,
        out_shape=jax.ShapeDtypeStruct((rows_f, width), x.dtype),
        grid_spec=pltpu.PrefetchScalarGridSpec(
            num_scalar_prefetch=0,
            grid=grid,
            in_specs=in_specs,
            out_specs=pl.BlockSpec((tile_rows, width), lambda i: (i, 0)),
        ),
        compiler_params=pltpu.CompilerParams(
            # Row axis is embarrassingly parallel: shards across the two TCs
            # on v7x megacore; measured no-op on single-TC v5e/v6e.
            dimension_semantics=("parallel",),
            vmem_limit_bytes=vmem_limit,
        ),
        cost_estimate=cost,
    )(xw, *extra_ins, w2, b2)

    if fold > 1:
        out = out.reshape(rows + pad_rows, h)
        if pad_rows:
            out = out[:rows]
        return out.reshape(orig_shape)
    return out.reshape(orig_shape)


def _ref_layer_norm(x, weight, bias, eps):
    u = jnp.mean(x, axis=-1, keepdims=True)
    s = jnp.mean((x - u) ** 2, axis=-1, keepdims=True)
    return weight * ((x - u) / jnp.sqrt(s + eps)) + bias


if __name__ == "__main__":
    # Module shapes: hidden_size = 32, input (batch=2, seq=8, hidden=32).
    hidden = 32
    batch, seq = 2, 8

    key = jax.random.PRNGKey(0)
    x = jax.random.normal(key, (batch, seq, hidden), dtype=jnp.float32)
    weight = jnp.ones((hidden,), dtype=jnp.float32)   # nn.Parameter(torch.ones)
    bias = jnp.zeros((hidden,), dtype=jnp.float32)    # nn.Parameter(torch.zeros)

    # Folded-path tolerances leave margin for the MXU's f32 matmul passes.
    TOL = dict(atol=2e-3, rtol=2e-3)

    y = layer_norm(x, weight, bias, eps=1e-12)
    jax.block_until_ready(y)
    ref = _ref_layer_norm(x, weight, bias, 1e-12)
    assert jnp.allclose(y, ref, **TOL), "folded path (H=32) mismatch"

    # Folded path, H=64 (fold=2), non-trivial params.
    kx, kw, kb = jax.random.split(jax.random.PRNGKey(0), 3)
    x_b = jax.random.normal(kx, (4, 6, 64), dtype=jnp.float32)
    w_b = 1.0 + 0.1 * jax.random.normal(kw, (64,), dtype=jnp.float32)
    b_b = 0.1 * jax.random.normal(kb, (64,), dtype=jnp.float32)
    y_b = layer_norm(x_b, w_b, b_b, eps=1e-12)
    jax.block_until_ready(y_b)
    assert jnp.allclose(y_b, _ref_layer_norm(x_b, w_b, b_b, 1e-12), **TOL), \
        "folded path (H=64) mismatch"

    # Folded path with host row-padding (rows=17 not a multiple of fold=4).
    x_p = jax.random.normal(jax.random.PRNGKey(1), (17, 32), dtype=jnp.float32)
    y_p = layer_norm(x_p, weight, bias, eps=1e-12)
    jax.block_until_ready(y_p)
    assert jnp.allclose(y_p, _ref_layer_norm(x_p, weight, bias, 1e-12), **TOL), \
        "folded path (row padding) mismatch"

    # Folded path via lcm (H=96 -> fold=4, width=384).
    x_q = jax.random.normal(jax.random.PRNGKey(2), (2, 4, 96), dtype=jnp.float32)
    w_q = 1.0 + 0.1 * jax.random.normal(jax.random.PRNGKey(6), (96,), dtype=jnp.float32)
    b_q = 0.1 * jax.random.normal(jax.random.PRNGKey(7), (96,), dtype=jnp.float32)
    y_q = layer_norm(x_q, w_q, b_q, eps=1e-12)
    jax.block_until_ready(y_q)
    assert jnp.allclose(y_q, _ref_layer_norm(x_q, w_q, b_q, 1e-12), **TOL), \
        "folded path (H=96) mismatch"

    # General lane-dense path (H=256) with forced multi-step grid + partial block.
    x_c = jax.random.normal(jax.random.PRNGKey(3), (3, 7, 256), dtype=jnp.float32)
    w_c = 1.0 + 0.1 * jax.random.normal(jax.random.PRNGKey(4), (256,), dtype=jnp.float32)
    b_c = 0.1 * jax.random.normal(jax.random.PRNGKey(5), (256,), dtype=jnp.float32)
    y_c = layer_norm(x_c, w_c, b_c, eps=1e-12, tile_rows=8)
    jax.block_until_ready(y_c)
    assert jnp.allclose(y_c, _ref_layer_norm(x_c, w_c, b_c, 1e-12),
                        atol=1e-4, rtol=1e-4), "general path mismatch"

    # Fallback masked path (H=200: lcm too large to fold).
    x_m = jax.random.normal(jax.random.PRNGKey(8), (16, 200), dtype=jnp.float32)
    w_m = 1.0 + 0.1 * jax.random.normal(jax.random.PRNGKey(9), (200,), dtype=jnp.float32)
    b_m = 0.1 * jax.random.normal(jax.random.PRNGKey(10), (200,), dtype=jnp.float32)
    y_m = layer_norm(x_m, w_m, b_m, eps=1e-12)
    jax.block_until_ready(y_m)
    assert jnp.allclose(y_m, _ref_layer_norm(x_m, w_m, b_m, 1e-12),
                        atol=1e-4, rtol=1e-4), "fallback path mismatch"

    print("KERNEL_OK")
</pallas_src>

<mosaic_0001>
module attributes {stable_mosaic.version = 11 : i64} {
  func.func @_layernorm_folded_kernel(%arg0: i32, %arg1: memref<4x128xf32, #tpu.memory_space<vmem>>, %arg2: memref<128x128xf32, #tpu.memory_space<vmem>>, %arg3: memref<1x128xf32, #tpu.memory_space<vmem>>, %arg4: memref<1x128xf32, #tpu.memory_space<vmem>>, %arg5: memref<4x128xf32, #tpu.memory_space<vmem>>) attributes {dimension_semantics = [#tpu.dimension_semantics<parallel>], iteration_bounds = array<i64: 1>, scalar_prefetch = 0 : i64, scratch_operands = 0 : i64, tpu.core_type = #tpu.core_type<tc>, window_params = [{transform_indices = @transform_0, window_bounds = array<i64: 4, 128>}, {pipeline_mode = #tpu.pipeline_mode<synchronous>, transform_indices = @transform_1, window_bounds = array<i64: 128, 128>}, {pipeline_mode = #tpu.pipeline_mode<synchronous>, transform_indices = @transform_2, window_bounds = array<i64: 1, 128>}, {pipeline_mode = #tpu.pipeline_mode<synchronous>, transform_indices = @transform_3, window_bounds = array<i64: 1, 128>}, {transform_indices = @transform_4, window_bounds = array<i64: 4, 128>}]} {
    %c0 = arith.constant 0 : index
    %c0_0 = arith.constant 0 : index
    %0 = vector.load %arg1[%c0, %c0_0] : memref<4x128xf32, #tpu.memory_space<vmem>>, vector<4x128xf32>
    %c0_1 = arith.constant 0 : index
    %c0_2 = arith.constant 0 : index
    %1 = vector.load %arg2[%c0_1, %c0_2] : memref<128x128xf32, #tpu.memory_space<vmem>>, vector<128x128xf32>
    %cst = arith.constant dense<0.000000e+00> : vector<4x128xf32>
    %2 = tpu.matmul %0, %1, %cst {dimension_numbers = #tpu.dot_dimension_numbers<[1], [0], [0], [1], [0, 0, 1, 1], [], []>} : vector<4x128xf32>, vector<128x128xf32>, vector<4x128xf32> -> vector<4x128xf32>
    %3 = arith.subf %0, %2 : vector<4x128xf32>
    %4 = arith.mulf %3, %3 : vector<4x128xf32>
    %cst_3 = arith.constant dense<0.000000e+00> : vector<4x128xf32>
    %5 = tpu.matmul %4, %1, %cst_3 {dimension_numbers = #tpu.dot_dimension_numbers<[1], [0], [0], [1], [0, 0, 1, 1], [], []>} : vector<4x128xf32>, vector<128x128xf32>, vector<4x128xf32> -> vector<4x128xf32>
    %cst_4 = arith.constant 9.99999996E-13 : f32
    %6 = vector.broadcast %cst_4 : f32 to vector<4x128xf32>
    %7 = arith.addf %5, %6 : vector<4x128xf32>
    %8 = math.rsqrt %7 : vector<4x128xf32>
    %9 = arith.mulf %3, %8 : vector<4x128xf32>
    %c0_5 = arith.constant 0 : index
    %c0_6 = arith.constant 0 : index
    %10 = vector.load %arg3[%c0_5, %c0_6] : memref<1x128xf32, #tpu.memory_space<vmem>>, vector<1x128xf32>
    %c0_7 = arith.constant 0 : index
    %c0_8 = arith.constant 0 : index
    %11 = vector.load %arg4[%c0_7, %c0_8] : memref<1x128xf32, #tpu.memory_space<vmem>>, vector<1x128xf32>
    %12 = vector.broadcast %10 : vector<1x128xf32> to vector<4x128xf32>
    %13 = arith.mulf %12, %9 : vector<4x128xf32>
    %14 = vector.broadcast %11 : vector<1x128xf32> to vector<4x128xf32>
    %15 = arith.addf %13, %14 : vector<4x128xf32>
    %c0_9 = arith.constant 0 : index
    %c0_10 = arith.constant 0 : index
    %16 = vector.load %arg5[%c0_9, %c0_10] : memref<4x128xf32, #tpu.memory_space<vmem>>, vector<4x128xf32>
    tpu.vector_store %arg5[%c0_9, %c0_10], %15 {strides = array<i32>} : memref<4x128xf32, #tpu.memory_space<vmem>>, vector<4x128xf32>,
    return
  }
  func.func @transform_0(%arg0: i32) -> (i32, i32) {
    %c0_i32 = arith.constant 0 : i32
    %c0_i32_0 = arith.constant 0 : i32
    return %arg0, %c0_i32 : i32, i32
  }
  func.func @transform_1(%arg0: i32) -> (i32, i32) {
    %c0_i32 = arith.constant 0 : i32
    %c0_i32_0 = arith.constant 0 : i32
    %c0_i32_1 = arith.constant 0 : i32
    return %c0_i32, %c0_i32_0 : i32, i32
  }
  func.func @transform_2(%arg0: i32) -> (i32, i32) {
    %c0_i32 = arith.constant 0 : i32
    %c0_i32_0 = arith.constant 0 : i32
    %c0_i32_1 = arith.constant 0 : i32
    return %c0_i32, %c0_i32_0 : i32, i32
  }
  func.func @transform_3(%arg0: i32) -> (i32, i32) {
    %c0_i32 = arith.constant 0 : i32
    %c0_i32_0 = arith.constant 0 : i32
    %c0_i32_1 = arith.constant 0 : i32
    return %c0_i32, %c0_i32_0 : i32, i32
  }
  func.func @transform_4(%arg0: i32) -> (i32, i32) {
    %c0_i32 = arith.constant 0 : i32
    %c0_i32_0 = arith.constant 0 : i32
    return %arg0, %c0_i32 : i32, i32
  }
}

</mosaic_0001>

<llo_original>
// kernel: tpu_custom_call.1
$region0: #{tpu_custom_call.1}
  #allocation0 [shape = 'u32[]', space=smem, size = 0x4, offset = 0x4, fixed_abs, tag = 'smem constant byte address 0x4 - core index']
  #allocation1 [shape = 'u32[144,128]{1,0:T(1,128)}', space=vmem, size = 0x12000, scoped, tag = 'internal scratch']
  %s0 = inlined_call_operand.hbm [shape: f32[4,128], index: 0, kind: input, shape index: {}]
  %s1 = inlined_call_operand.hbm [shape: f32[128,128], index: 1, kind: input, shape index: {}]
  %s2 = inlined_call_operand.vmem [shape: f32[1,128], index: 2, kind: input, shape index: {}]
  %s3 = inlined_call_operand.vmem [shape: f32[1,128], index: 3, kind: input, shape index: {}]
  %s4 = inlined_call_operand.hbm [shape: f32[4,128], index: 4, kind: output, shape index: {}]
  %s5 = sld [smem:[#allocation0]]
  $region34: #{tpu_custom_call.1} parent=0
    _
  %s7 = ssub.s32 1, %s5
  %s8 = scalar_select 0, %s7, %s5
  $region1: #{tpu_custom_call.1} parent=0
    #allocation2 [shape = 'u8[2048]{0}', space=vmem, size = 0x800, scoped, tag = 'input window, operand 0, single buffered']
    #allocation3 [shape = 's32[1]{0}', space=sflag, size = 0x4, scoped, tag = 'scoped memory for tpu_custom_call.1']
    #allocation4 [shape = 's32[1]{0}', space=sflag, size = 0x4, scoped, tag = 'scoped memory for tpu_custom_call.1']
    #allocation5 [shape = 'u8[65536]{0}', space=vmem, size = 0x10000, scoped, tag = 'input window, operand 1, single buffered']
    #allocation6 [shape = 's32[1]{0}', space=sflag, size = 0x4, scoped, tag = 'scoped memory for tpu_custom_call.1']
    #allocation7 [shape = 'u8[2048]{0}', space=vmem, size = 0x800, scoped, tag = 'output window, operand 0, single buffered']
    %9 = vsyncpa [#allocation3], 0
    %10 = vsyncpa [#allocation6], 0
    %11 = vsyncpa [#allocation4], 0
    // Predicated region
    $region2: #{tpu_custom_call.1} parent=1 // pred_check
      _
    $region3: #{tpu_custom_call.1} parent=1 // pred_check_branch
      %13 = sbr.rel (0) target = $region5
    $region4: #{tpu_custom_call.1} parent=1 // pred_region
      %s15 = ssub.s32 64, 64
      %16 = vsyncadd [#allocation3], %s15
      %s18 = sshll.u32 [#allocation2], 4
      %s19 = int_to_ptr.vmem [resolvable:$true] %s18
      %21 = dma.hbm_to_vmem [thread:$0]  %s0, 64, %s19, [#allocation3]
    $region5: #{tpu_custom_call.1} parent=1 // pred_fallthru
      _
    // Predicated region
    $region6: #{tpu_custom_call.1} parent=1 // pred_check
      _
    $region7: #{tpu_custom_call.1} parent=1 // pred_check_branch
      %23 = sbr.rel (0) target = $region9
    $region8: #{tpu_custom_call.1} parent=1 // pred_region
      %s25 = ssub.s32 2048, 2048
      %26 = vsyncadd [#allocation6], %s25
      %s27 = sshll.u32 [#allocation5], 4
      %s28 = int_to_ptr.vmem [resolvable:$true] %s27
      %33 = dma.hbm_to_vmem [thread:$0]  %s1, 2048, %s28, [#allocation6], 128, 128, 8
    $region9: #{tpu_custom_call.1} parent=1 // pred_fallthru
      _
    // Predicated region
    $region10: #{tpu_custom_call.1} parent=1 // pred_check
      _
    $region11: #{tpu_custom_call.1} parent=1 // pred_check_branch
      %35 = sbr.rel (0) target = $region13
    $region12: #{tpu_custom_call.1} parent=1 // pred_region
      _
    $region13: #{tpu_custom_call.1} parent=1 // pred_fallthru
      _
    // Predicated region
    $region14: #{tpu_custom_call.1} parent=1 // pred_check
      _
    $region15: #{tpu_custom_call.1} parent=1 // pred_check_branch
      %37 = sbr.rel (0) target = $region17
    $region16: #{tpu_custom_call.1} parent=1 // pred_region
      _
    $region17: #{tpu_custom_call.1} parent=1 // pred_fallthru
      _
    // Predicated region
    $region18: #{tpu_custom_call.1} parent=1 // pred_check
      _
    $region19: #{tpu_custom_call.1} parent=1 // pred_check_branch
      %39 = sbr.rel (0) target = $region21
    $region20: #{tpu_custom_call.1} parent=1 // pred_region
      %40 = dma.done [#allocation3], 64
    $region21: #{tpu_custom_call.1} parent=1 // pred_fallthru
      _
    // Predicated region
    $region22: #{tpu_custom_call.1} parent=1 // pred_check
      _
    $region23: #{tpu_custom_call.1} parent=1 // pred_check_branch
      %42 = sbr.rel (0) target = $region25
    $region24: #{tpu_custom_call.1} parent=1 // pred_region
      %43 = dma.done [#allocation6], 2048
    $region25: #{tpu_custom_call.1} parent=1 // pred_fallthru
      _
    %v44 = vld [vmem:[#allocation2] sm:$0xf]
    %v45 = vld [vmem:[#allocation5] sm:$0xff]
    %v46 = vld [vmem:[#allocation5 + $0x8] sm:$0xff]
    %v47 = vld [vmem:[#allocation5 + $0x10] sm:$0xff]
    %v48 = vld [vmem:[#allocation5 + $0x18] sm:$0xff]
    %v49 = vld [vmem:[#allocation5 + $0x20] sm:$0xff]
    %v50 = vld [vmem:[#allocation5 + $0x28] sm:$0xff]
    %v51 = vld [vmem:[#allocation5 + $0x30] sm:$0xff]
    %v52 = vld [vmem:[#allocation5 + $0x38] sm:$0xff]
    %v53 = vld [vmem:[#allocation5 + $0x40] sm:$0xff]
    %v54 = vld [vmem:[#allocation5 + $0x48] sm:$0xff]
    %v55 = vld [vmem:[#allocation5 + $0x50] sm:$0xff]
    %v56 = vld [vmem:[#allocation5 + $0x58] sm:$0xff]
    %v57 = vld [vmem:[#allocation5 + $0x60] sm:$0xff]
    %v58 = vld [vmem:[#allocation5 + $0x68] sm:$0xff]
    %v59 = vld [vmem:[#allocation5 + $0x70] sm:$0xff]
    %v60 = vld [vmem:[#allocation5 + $0x78] sm:$0xff]
    %61 = vmatprep.subr.mxu0 0.0
    %62 = vmatpush1.msra.mxu0 %v45
    %63 = vmatprep.subr.mxu0 0.0
    %64 = vmatpush1.msra.mxu0 %v46
    %65 = vmatprep.subr.mxu0 0.0
    %66 = vmatpush1.msra.mxu0 %v47
    %67 = vmatprep.subr.mxu0 0.0
    %68 = vmatpush1.msra.mxu0 %v48
    %69 = vmatprep.subr.mxu0 0.0
    %70 = vmatpush1.msra.mxu0 %v49
    %71 = vmatprep.subr.mxu0 0.0
    %72 = vmatpush1.msra.mxu0 %v50
    %73 = vmatprep.subr.mxu0 0.0
    %74 = vmatpush1.msra.mxu0 %v51
    %75 = vmatprep.subr.mxu0 0.0
    %76 = vmatpush1.msra.mxu0 %v52
    %77 = vmatprep.subr.mxu0 0.0
    %78 = vmatpush1.msra.mxu0 %v53
    %79 = vmatprep.subr.mxu0 0.0
    %80 = vmatpush1.msra.mxu0 %v54
    %81 = vmatprep.subr.mxu0 0.0
    %82 = vmatpush1.msra.mxu0 %v55
    %83 = vmatprep.subr.mxu0 0.0
    %84 = vmatpush1.msra.mxu0 %v56
    %85 = vmatprep.subr.mxu0 0.0
    %86 = vmatpush1.msra.mxu0 %v57
    %87 = vmatprep.subr.mxu0 0.0
    %88 = vmatpush1.msra.mxu0 %v58
    %89 = vmatprep.subr.mxu0 0.0
    %90 = vmatpush1.msra.mxu0 %v59
    %91 = vmatprep.subr.mxu0 0.0
    %92 = vmatpush1.msra.mxu0 %v60
    %93 = vmatprep.subr.mxu0 0.0
    %94 = vmatpush1.msra.mxu0 0.0
    %95 = vmatprep.subr.mxu0 0.0
    %96 = vmatpush1.msra.mxu0 0.0
    %97 = vmatprep.subr.mxu0 0.0
    %98 = vmatpush1.msra.mxu0 0.0
    %99 = vmatprep.subr.mxu0 0.0
    %100 = vmatpush1.msra.mxu0 0.0
    %101 = vmatprep.subr.mxu0 0.0
    %102 = vmatpush1.msra.mxu0 0.0
    %103 = vmatprep.subr.mxu0 0.0
    %104 = vmatpush1.msra.mxu0 0.0
    %105 = vmatprep.subr.mxu0 0.0
    %106 = vmatpush1.msra.mxu0 0.0
    %107 = vmatprep.subr.mxu0 0.0
    %108 = vmatpush1.msra.mxu0 0.0
    %109 = vmatprep.subr.mxu0 0.0
    %110 = vmatpush1.msra.mxu0 0.0
    %111 = vmatprep.subr.mxu0 0.0
    %112 = vmatpush1.msra.mxu0 0.0
    %113 = vmatprep.subr.mxu0 0.0
    %114 = vmatpush1.msra.mxu0 0.0
    %115 = vmatprep.subr.mxu0 0.0
    %116 = vmatpush1.msra.mxu0 0.0
    %117 = vmatprep.subr.mxu0 0.0
    %118 = vmatpush1.msra.mxu0 0.0
    %119 = vmatprep.subr.mxu0 0.0
    %120 = vmatpush1.msra.mxu0 0.0
    %121 = vmatprep.subr.mxu0 0.0
    %122 = vmatpush1.msra.mxu0 0.0
    %123 = vmatprep.subr.mxu0 0.0
    %124 = vmatpush1.msra.mxu0 0.0
    %125 = vmatprep.mubr.f32.mxu0 0.0
    %126 = vmatmul.mubr.f32.gmra.mrb[0].mxu0 %v44
    %v127 = vpop.f32.mrb[0].mxu0
    %v128 = vadd.f32 0.0, %v127
    %v129 = vpop.f32.mrb[0].mxu0
    %130 = vdwg.mxu0
    %v131 = vsub.f32 %v44, %v128
    %v132 = vmul.f32 %v131, %v131
    %133 = vmatprep.subr.mxu0 0.0
    %134 = vmatpush1.msra.mxu0 %v45
    %135 = vmatprep.subr.mxu0 0.0
    %136 = vmatpush1.msra.mxu0 %v46
    %137 = vmatprep.subr.mxu0 0.0
    %138 = vmatpush1.msra.mxu0 %v47
    %139 = vmatprep.subr.mxu0 0.0
    %140 = vmatpush1.msra.mxu0 %v48
    %141 = vmatprep.subr.mxu0 0.0
    %142 = vmatpush1.msra.mxu0 %v49
    %143 = vmatprep.subr.mxu0 0.0
    %144 = vmatpush1.msra.mxu0 %v50
    %145 = vmatprep.subr.mxu0 0.0
    %146 = vmatpush1.msra.mxu0 %v51
    %147 = vmatprep.subr.mxu0 0.0
    %148 = vmatpush1.msra.mxu0 %v52
    %149 = vmatprep.subr.mxu0 0.0
    %150 = vmatpush1.msra.mxu0 %v53
    %151 = vmatprep.subr.mxu0 0.0
    %152 = vmatpush1.msra.mxu0 %v54
    %153 = vmatprep.subr.mxu0 0.0
    %154 = vmatpush1.msra.mxu0 %v55
    %155 = vmatprep.subr.mxu0 0.0
    %156 = vmatpush1.msra.mxu0 %v56
    %157 = vmatprep.subr.mxu0 0.0
    %158 = vmatpush1.msra.mxu0 %v57
    %159 = vmatprep.subr.mxu0 0.0
    %160 = vmatpush1.msra.mxu0 %v58
    %161 = vmatprep.subr.mxu0 0.0
    %162 = vmatpush1.msra.mxu0 %v59
    %163 = vmatprep.subr.mxu0 0.0
    %164 = vmatpush1.msra.mxu0 %v60
    %165 = vmatprep.subr.mxu0 0.0
    %166 = vmatpush1.msra.mxu0 0.0
    %167 = vmatprep.subr.mxu0 0.0
    %168 = vmatpush1.msra.mxu0 0.0
    %169 = vmatprep.subr.mxu0 0.0
    %170 = vmatpush1.msra.mxu0 0.0
    %171 = vmatprep.subr.mxu0 0.0
    %172 = vmatpush1.msra.mxu0 0.0
    %173 = vmatprep.subr.mxu0 0.0
    %174 = vmatpush1.msra.mxu0 0.0
    %175 = vmatprep.subr.mxu0 0.0
    %176 = vmatpush1.msra.mxu0 0.0
    %177 = vmatprep.subr.mxu0 0.0
    %178 = vmatpush1.msra.mxu0 0.0
    %179 = vmatprep.subr.mxu0 0.0
    %180 = vmatpush1.msra.mxu0 0.0
    %181 = vmatprep.subr.mxu0 0.0
    %182 = vmatpush1.msra.mxu0 0.0
    %183 = vmatprep.subr.mxu0 0.0
    %184 = vmatpush1.msra.mxu0 0.0
    %185 = vmatprep.subr.mxu0 0.0
    %186 = vmatpush1.msra.mxu0 0.0
    %187 = vmatprep.subr.mxu0 0.0
    %188 = vmatpush1.msra.mxu0 0.0
    %189 = vmatprep.subr.mxu0 0.0
    %190 = vmatpush1.msra.mxu0 0.0
    %191 = vmatprep.subr.mxu0 0.0
    %192 = vmatpush1.msra.mxu0 0.0
    %193 = vmatprep.subr.mxu0 0.0
    %194 = vmatpush1.msra.mxu0 0.0
    %195 = vmatprep.subr.mxu0 0.0
    %196 = vmatpush1.msra.mxu0 0.0
    %197 = vmatprep.mubr.f32.mxu0 0.0
    %198 = vmatmul.mubr.f32.gmra.mrb[0].mxu0 %v132
    %v199 = vpop.f32.mrb[0].mxu0
    %v200 = vadd.f32 1e-12, %v199
    %v201 = vpop.f32.mrb[0].mxu0
    %202 = vdwg.mxu0
    %v203 = vrsqrt.pop %v200
    %v204 = vmul.f32 %v131, %v203
    %v205 = vld [vmem:[%s2] sm:$0x1]
    %v206 = vld [vmem:[%s3] sm:$0x1]
    %v208 = vlaneseq
    %v209 = vshrl.u32 %v208, 7
    %v210 = vsub.s32 0, %v209
    %v211 = vrot.slane %v205, %v210
    %v213 = vmul.f32 %v211, %v204
    %v215 = vlaneseq
    %v216 = vshrl.u32 %v215, 7
    %v217 = vsub.s32 0, %v216
    %v218 = vrot.slane %v206, %v217
    %v220 = vadd.f32 %v213, %v218
    %221 = vst [vmem:[#allocation7] sm:$0xf] %v220
    // Predicated region
    $region26: #{tpu_custom_call.1} parent=1 // pred_check
      _
    $region27: #{tpu_custom_call.1} parent=1 // pred_check_branch
      %223 = sbr.rel (0) target = $region29
    $region28: #{tpu_custom_call.1} parent=1 // pred_region
      %s225 = ssub.s32 64, 64
      %226 = vsyncadd [#allocation4], %s225
      %s228 = sshll.u32 [#allocation7], 4
      %s229 = int_to_ptr.vmem [resolvable:$true] %s228
      %231 = dma.vmem_to_hbm [thread:$0]  %s229, 64, %s4, [#allocation4]
    $region29: #{tpu_custom_call.1} parent=1 // pred_fallthru
      _
    // Predicated region
    $region30: #{tpu_custom_call.1} parent=1 // pred_check
      _
    $region31: #{tpu_custom_call.1} parent=1 // pred_check_branch
      %233 = sbr.rel (0) target = $region33
    $region32: #{tpu_custom_call.1} parent=1 // pred_region
      %234 = dma.done [#allocation4], 64
    $region33: #{tpu_custom_call.1} parent=1 // pred_fallthru
      _
    %235 = vsyncpa [#allocation3], 1
    %236 = vsyncpa [#allocation6], 1
    %237 = vsyncpa [#allocation4], 1

</llo_original>
